<compile_context>
chip_gen: v6e
topology: v6e:2x2x1
jax: 0.10.0
libtpu: 0.0.40
codegen_flags: <defaults>
</compile_context>

<pallas_src>
import functools

import jax
import jax.numpy as jnp
from jax import lax
from jax.experimental import pallas as pl
from jax.experimental.pallas import tpu as pltpu


def _pa_kernel(x_ref, wb_ref, m_ref, o_ref, *, width):
    # x_ref : (Cb, L)  input block, L = H*W (flattened spatial on lanes)
    # wb_ref: (Cb, 10) per-channel [w00, w01, w02, w10, ..., w22, bias]
    # m_ref : (2, L)   f32 row-boundary masks: [dw=-1 tap valid, dw=+1 tap valid]
    # o_ref : (Cb, L)
    _, ell = x_ref.shape
    height = ell // width

    xf = x_ref[...].astype(jnp.float32)
    wb = wb_ref[...].astype(jnp.float32)             # (Cb, 10)
    mm = m_ref[...]                                  # (2, L)

    # Hoisted per-tap per-channel weights: (Cb, 1) columns broadcast on lanes.
    wt = [wb[:, t:t + 1] for t in range(10)]

    # Horizontal taps (dw = -1/0/+1): lane rolls (XLU) + row-boundary masks.
    # pltpu.roll follows jnp.roll semantics: out[i] = in[i - shift].
    x_wm1 = pltpu.roll(xf, shift=1, axis=1) * mm[0:1, :]          # x[h, w-1]
    x_wp1 = pltpu.roll(xf, shift=ell - 1, axis=1) * mm[1:2, :]    # x[h, w+1]
    xw = (x_wm1, xf, x_wp1)

    # Vertical border masks from the flat lane index.
    f = lax.broadcasted_iota(jnp.int32, (1, ell), 1)
    top_ok = (f >= width).astype(jnp.float32)                  # row h-1 exists
    bot_ok = (f < (height - 1) * width).astype(jnp.float32)    # row h+1 exists

    acc = None
    for kh in range(3):                                        # dh = kh - 1
        band = xw[0] * wt[kh * 3 + 0]
        band = band + xw[1] * wt[kh * 3 + 1]
        band = band + xw[2] * wt[kh * 3 + 2]
        if kh == 0:    # need band[h-1]: roll down one row, zero the top row
            band = pltpu.roll(band, shift=width, axis=1) * top_ok
        elif kh == 2:  # need band[h+1]: roll up one row, zero the bottom row
            band = pltpu.roll(band, shift=ell - width, axis=1) * bot_ok
        acc = band if acc is None else acc + band

    acc = acc + wt[9]                                          # bias
    gate = jax.nn.sigmoid(acc)                                 # EUP
    o_ref[...] = (xf * gate).astype(o_ref.dtype)


def _pick_channel_block(c, l, itemsize, budget_bytes):
    """Largest channel block that divides C, fits the per-block budget and
    satisfies the TPU second-minor block constraint (multiple of 8 or full C)."""
    if c * l * itemsize <= budget_bytes:
        return c
    best = 0
    for d in range(8, c, 8):
        if c % d == 0 and d * l * itemsize <= budget_bytes:
            best = d
    return best if best > 0 else c


def pa_forward_nchw(x, w_torch, bias, *, block_budget_bytes=2 * 1024 * 1024):
    """x: (N, C, H, W); w_torch: (C, 1, 3, 3) depthwise weight; bias: (C,)."""
    n, c, h, w = x.shape
    l = h * w
    x2 = x.reshape(n, c, l)                          # free reshape (no HBM pass)

    # (C, 10): 9 taps in row-major (kh*3+kw) order + bias, one row per channel.
    wb = jnp.concatenate(
        [w_torch.reshape(c, 9).astype(jnp.float32),
         bias.reshape(c, 1).astype(jnp.float32)], axis=1)

    # Row-boundary masks for the dw = -1 / +1 taps (tiny, constant index_map).
    col = jnp.arange(l, dtype=jnp.int32) % w
    masks = jnp.stack([col > 0, col < w - 1]).astype(jnp.float32)   # (2, L)

    cb = _pick_channel_block(c, l, x.dtype.itemsize, block_budget_bytes)
    grid = (n, c // cb)

    kernel = functools.partial(_pa_kernel, width=w)
    out2 = pl.pallas_call(
        kernel,
        out_shape=jax.ShapeDtypeStruct((n, c, l), x.dtype),
        grid=grid,
        in_specs=[
            pl.BlockSpec((None, cb, l), lambda ni, ci: (ni, ci, 0)),
            pl.BlockSpec((cb, 10), lambda ni, ci: (ci, 0)),
            pl.BlockSpec((2, l), lambda ni, ci: (0, 0)),
        ],
        out_specs=pl.BlockSpec((None, cb, l), lambda ni, ci: (ni, ci, 0)),
        compiler_params=pltpu.CompilerParams(
            dimension_semantics=("parallel", "parallel"),
            # Blocks are <= a few MiB; 32 MiB is safe headroom on all of
            # v5e (128 MiB), v6e (128 MiB) and v7x (64 MiB).
            vmem_limit_bytes=32 * 1024 * 1024,
        ),
    )(x2, wb, masks)
    return out2.reshape(n, c, h, w)


def _reference_nchw(x_nchw, w_torch, bias):
    """Pure-JAX reference (depthwise conv + sigmoid gate)."""
    c = x_nchw.shape[1]
    conv = lax.conv_general_dilated(
        x_nchw, w_torch,
        window_strides=(1, 1), padding="SAME",
        feature_group_count=c,
        dimension_numbers=("NCHW", "OIHW", "NCHW"),
    ) + bias.reshape(1, c, 1, 1)
    return x_nchw * jax.nn.sigmoid(conv)


if __name__ == "__main__":
    key = jax.random.PRNGKey(0)
    n, c, h, w = 2, 4, 16, 16
    k_x, k_w, k_b = jax.random.split(key, 3)

    x = jax.random.normal(k_x, (n, c, h, w), dtype=jnp.float32)
    # Deterministic parameter init (shapes from nn.Conv2d(dim, dim, 3, groups=dim)).
    fan_in = 1 * 3 * 3
    bound = 1.0 / (fan_in ** 0.5)
    w_torch = jax.random.uniform(k_w, (c, 1, 3, 3), jnp.float32, -bound, bound)
    bias = jax.random.uniform(k_b, (c,), jnp.float32, -bound, bound)

    out = pa_forward_nchw(x, w_torch, bias)
    out = jax.block_until_ready(out)

    ref = _reference_nchw(x, w_torch, bias)
    assert out.shape == (n, c, h, w)
    assert jnp.allclose(out, ref, atol=1e-5, rtol=1e-5), "mismatch vs reference"

    print("KERNEL_OK")
</pallas_src>

<mosaic_0001>
module attributes {stable_mosaic.version = 11 : i64} {
  func.func @_pa_kernel(%arg0: i32, %arg1: i32, %arg2: memref<1x4x256xf32, #tpu.memory_space<vmem>>, %arg3: memref<4x10xf32, #tpu.memory_space<vmem>>, %arg4: memref<2x256xf32, #tpu.memory_space<vmem>>, %arg5: memref<1x4x256xf32, #tpu.memory_space<vmem>>) attributes {dimension_semantics = [#tpu.dimension_semantics<parallel>, #tpu.dimension_semantics<parallel>], iteration_bounds = array<i64: 2, 1>, scalar_prefetch = 0 : i64, scratch_operands = 0 : i64, tpu.core_type = #tpu.core_type<tc>, window_params = [{transform_indices = @transform_0, window_bounds = array<i64: 1, 4, 256>}, {transform_indices = @transform_1, window_bounds = array<i64: 4, 10>}, {pipeline_mode = #tpu.pipeline_mode<synchronous>, transform_indices = @transform_2, window_bounds = array<i64: 2, 256>}, {transform_indices = @transform_3, window_bounds = array<i64: 1, 4, 256>}]} {
    %c0 = arith.constant 0 : index
    %c0_0 = arith.constant 0 : index
    %c0_1 = arith.constant 0 : index
    %0 = vector.load %arg2[%c0, %c0_0, %c0_1] : memref<1x4x256xf32, #tpu.memory_space<vmem>>, vector<1x4x256xf32>
    %1 = vector.shape_cast %0 : vector<1x4x256xf32> to vector<4x256xf32>
    %c0_2 = arith.constant 0 : index
    %c0_3 = arith.constant 0 : index
    %2 = vector.load %arg3[%c0_2, %c0_3] : memref<4x10xf32, #tpu.memory_space<vmem>>, vector<4x10xf32>
    %c0_4 = arith.constant 0 : index
    %c0_5 = arith.constant 0 : index
    %3 = vector.load %arg4[%c0_4, %c0_5] : memref<2x256xf32, #tpu.memory_space<vmem>>, vector<2x256xf32>
    %4 = vector.extract_strided_slice %2 {offsets = [0, 0], sizes = [4, 1], strides = [1, 1]} : vector<4x10xf32> to vector<4x1xf32>
    %5 = vector.extract_strided_slice %2 {offsets = [0, 1], sizes = [4, 1], strides = [1, 1]} : vector<4x10xf32> to vector<4x1xf32>
    %6 = vector.extract_strided_slice %2 {offsets = [0, 2], sizes = [4, 1], strides = [1, 1]} : vector<4x10xf32> to vector<4x1xf32>
    %7 = vector.extract_strided_slice %2 {offsets = [0, 3], sizes = [4, 1], strides = [1, 1]} : vector<4x10xf32> to vector<4x1xf32>
    %8 = vector.extract_strided_slice %2 {offsets = [0, 4], sizes = [4, 1], strides = [1, 1]} : vector<4x10xf32> to vector<4x1xf32>
    %9 = vector.extract_strided_slice %2 {offsets = [0, 5], sizes = [4, 1], strides = [1, 1]} : vector<4x10xf32> to vector<4x1xf32>
    %10 = vector.extract_strided_slice %2 {offsets = [0, 6], sizes = [4, 1], strides = [1, 1]} : vector<4x10xf32> to vector<4x1xf32>
    %11 = vector.extract_strided_slice %2 {offsets = [0, 7], sizes = [4, 1], strides = [1, 1]} : vector<4x10xf32> to vector<4x1xf32>
    %12 = vector.extract_strided_slice %2 {offsets = [0, 8], sizes = [4, 1], strides = [1, 1]} : vector<4x10xf32> to vector<4x1xf32>
    %13 = vector.extract_strided_slice %2 {offsets = [0, 9], sizes = [4, 1], strides = [1, 1]} : vector<4x10xf32> to vector<4x1xf32>
    %c1_i32 = arith.constant 1 : i32
    %14 = tpu.dynamic_rotate %1 by %c1_i32 dim 1 : vector<4x256xf32>, i32 -> vector<4x256xf32>
    %15 = vector.extract_strided_slice %3 {offsets = [0, 0], sizes = [1, 256], strides = [1, 1]} : vector<2x256xf32> to vector<1x256xf32>
    %16 = vector.broadcast %15 : vector<1x256xf32> to vector<4x256xf32>
    %17 = arith.mulf %14, %16 : vector<4x256xf32>
    %c255_i32 = arith.constant 255 : i32
    %18 = tpu.dynamic_rotate %1 by %c255_i32 dim 1 : vector<4x256xf32>, i32 -> vector<4x256xf32>
    %19 = vector.extract_strided_slice %3 {offsets = [1, 0], sizes = [1, 256], strides = [1, 1]} : vector<2x256xf32> to vector<1x256xf32>
    %20 = vector.broadcast %19 : vector<1x256xf32> to vector<4x256xf32>
    %21 = arith.mulf %18, %20 : vector<4x256xf32>
    %22 = tpu.iota {dimensions = array<i32: 1>} : vector<1x256xi32>
    %c16_i32 = arith.constant 16 : i32
    %23 = vector.broadcast %c16_i32 : i32 to vector<1x256xi32>
    %24 = arith.cmpi sge, %22, %23 : vector<1x256xi32>
    %25 = arith.extui %24 : vector<1x256xi1> to vector<1x256xi32>
    %26 = arith.sitofp %25 : vector<1x256xi32> to vector<1x256xf32>
    %c240_i32 = arith.constant 240 : i32
    %27 = vector.broadcast %c240_i32 : i32 to vector<1x256xi32>
    %28 = arith.cmpi slt, %22, %27 : vector<1x256xi32>
    %29 = arith.extui %28 : vector<1x256xi1> to vector<1x256xi32>
    %30 = arith.sitofp %29 : vector<1x256xi32> to vector<1x256xf32>
    %31 = vector.broadcast %4 : vector<4x1xf32> to vector<4x256xf32>
    %32 = arith.mulf %17, %31 : vector<4x256xf32>
    %33 = vector.broadcast %5 : vector<4x1xf32> to vector<4x256xf32>
    %34 = arith.mulf %1, %33 : vector<4x256xf32>
    %35 = arith.addf %32, %34 : vector<4x256xf32>
    %36 = vector.broadcast %6 : vector<4x1xf32> to vector<4x256xf32>
    %37 = arith.mulf %21, %36 : vector<4x256xf32>
    %38 = arith.addf %35, %37 : vector<4x256xf32>
    %c16_i32_6 = arith.constant 16 : i32
    %39 = tpu.dynamic_rotate %38 by %c16_i32_6 dim 1 : vector<4x256xf32>, i32 -> vector<4x256xf32>
    %40 = vector.broadcast %26 : vector<1x256xf32> to vector<4x256xf32>
    %41 = arith.mulf %39, %40 : vector<4x256xf32>
    %42 = vector.broadcast %7 : vector<4x1xf32> to vector<4x256xf32>
    %43 = arith.mulf %17, %42 : vector<4x256xf32>
    %44 = vector.broadcast %8 : vector<4x1xf32> to vector<4x256xf32>
    %45 = arith.mulf %1, %44 : vector<4x256xf32>
    %46 = arith.addf %43, %45 : vector<4x256xf32>
    %47 = vector.broadcast %9 : vector<4x1xf32> to vector<4x256xf32>
    %48 = arith.mulf %21, %47 : vector<4x256xf32>
    %49 = arith.addf %46, %48 : vector<4x256xf32>
    %50 = arith.addf %41, %49 : vector<4x256xf32>
    %51 = vector.broadcast %10 : vector<4x1xf32> to vector<4x256xf32>
    %52 = arith.mulf %17, %51 : vector<4x256xf32>
    %53 = vector.broadcast %11 : vector<4x1xf32> to vector<4x256xf32>
    %54 = arith.mulf %1, %53 : vector<4x256xf32>
    %55 = arith.addf %52, %54 : vector<4x256xf32>
    %56 = vector.broadcast %12 : vector<4x1xf32> to vector<4x256xf32>
    %57 = arith.mulf %21, %56 : vector<4x256xf32>
    %58 = arith.addf %55, %57 : vector<4x256xf32>
    %c240_i32_7 = arith.constant 240 : i32
    %59 = tpu.dynamic_rotate %58 by %c240_i32_7 dim 1 : vector<4x256xf32>, i32 -> vector<4x256xf32>
    %60 = vector.broadcast %30 : vector<1x256xf32> to vector<4x256xf32>
    %61 = arith.mulf %59, %60 : vector<4x256xf32>
    %62 = arith.addf %50, %61 : vector<4x256xf32>
    %63 = vector.broadcast %13 : vector<4x1xf32> to vector<4x256xf32>
    %64 = arith.addf %62, %63 : vector<4x256xf32>
    %65 = arith.negf %64 : vector<4x256xf32>
    %66 = math.exp %65 : vector<4x256xf32>
    %cst = arith.constant 1.000000e+00 : f32
    %67 = vector.broadcast %cst : f32 to vector<4x256xf32>
    %68 = arith.addf %67, %66 : vector<4x256xf32>
    %69 = arith.divf %67, %68 : vector<4x256xf32>
    %70 = arith.mulf %1, %69 : vector<4x256xf32>
    %c0_8 = arith.constant 0 : index
    %c0_9 = arith.constant 0 : index
    %c0_10 = arith.constant 0 : index
    %71 = vector.load %arg5[%c0_8, %c0_9, %c0_10] : memref<1x4x256xf32, #tpu.memory_space<vmem>>, vector<1x4x256xf32>
    %72 = vector.shape_cast %71 : vector<1x4x256xf32> to vector<4x256xf32>
    %73 = vector.shape_cast %70 : vector<4x256xf32> to vector<1x4x256xf32>
    tpu.vector_store %arg5[%c0_8, %c0_9, %c0_10], %73 {strides = array<i32>} : memref<1x4x256xf32, #tpu.memory_space<vmem>>, vector<1x4x256xf32>,
    return
  }
  func.func @transform_0(%arg0: i32, %arg1: i32) -> (i32, i32, i32) {
    %c0_i32 = arith.constant 0 : i32
    %c0_i32_0 = arith.constant 0 : i32
    return %arg0, %arg1, %c0_i32 : i32, i32, i32
  }
  func.func @transform_1(%arg0: i32, %arg1: i32) -> (i32, i32) {
    %c0_i32 = arith.constant 0 : i32
    %c0_i32_0 = arith.constant 0 : i32
    return %arg1, %c0_i32 : i32, i32
  }
  func.func @transform_2(%arg0: i32, %arg1: i32) -> (i32, i32) {
    %c0_i32 = arith.constant 0 : i32
    %c0_i32_0 = arith.constant 0 : i32
    %c0_i32_1 = arith.constant 0 : i32
    return %c0_i32, %c0_i32_0 : i32, i32
  }
  func.func @transform_3(%arg0: i32, %arg1: i32) -> (i32, i32, i32) {
    %c0_i32 = arith.constant 0 : i32
    %c0_i32_0 = arith.constant 0 : i32
    return %arg0, %arg1, %c0_i32 : i32, i32, i32
  }
}

</mosaic_0001>

<llo_original>
// kernel: tpu_custom_call.1
$region0: #{tpu_custom_call.1}
  #allocation0 [shape = 'u32[]', space=smem, size = 0x4, offset = 0x4, fixed_abs, tag = 'smem constant byte address 0x4 - core index']
  #allocation1 [shape = 'u32[144,128]{1,0:T(1,128)}', space=vmem, size = 0x12000, scoped, tag = 'internal scratch']
  %s0 = inlined_call_operand.hbm [shape: f32[2,4,256], index: 0, kind: input, shape index: {}]
  %s1 = inlined_call_operand.hbm [shape: f32[4,10], index: 1, kind: input, shape index: {}]
  %s2 = inlined_call_operand.hbm [shape: f32[2,256], index: 2, kind: input, shape index: {}]
  %s3 = inlined_call_operand.hbm [shape: f32[2,4,256], index: 3, kind: output, shape index: {}]
  %s4 = sld [smem:[#allocation0]]
  $region57: #{tpu_custom_call.1} parent=0
    _
  %s6 = ssub.s32 1, %s4
  %s7 = scalar_select 0, %s6, %s4
  $region1: #{tpu_custom_call.1} parent=0
    #allocation2 [shape = 'u8[8192]{0}', space=vmem, size = 0x2000, scoped, tag = 'input window, operand 0']
    #allocation3 [shape = 's32[2]{0}', space=sflag, size = 0x8, scoped, tag = 'scoped memory for tpu_custom_call.1']
    #allocation4 [shape = 's32[2]{0}', space=sflag, size = 0x8, scoped, tag = 'scoped memory for tpu_custom_call.1']
    #allocation5 [shape = 'u8[2048]{0}', space=vmem, size = 0x800, scoped, tag = 'input window, operand 1, single buffered']
    #allocation6 [shape = 's32[1]{0}', space=sflag, size = 0x4, scoped, tag = 'scoped memory for tpu_custom_call.1']
    #allocation7 [shape = 'u8[2048]{0}', space=vmem, size = 0x800, scoped, tag = 'input window, operand 2, single buffered']
    #allocation8 [shape = 'u8[8192]{0}', space=vmem, size = 0x2000, scoped, tag = 'output window, operand 0']
    %8 = vsyncpa [#allocation3], 0
    %s9 = scalar_lea.sflag [#allocation3], 1
    %10 = vsyncpa %s9, 0
    %11 = vsyncpa [#allocation6], 0
    %12 = vsyncpa [#allocation4], 0
    %s13 = scalar_lea.sflag [#allocation4], 1
    %14 = vsyncpa %s13, 0
    loop: start=0, step=1, limit=4
    $region2: #{tpu_custom_call.1} parent=1 // loop_pre_header
      _
    $region3: #{tpu_custom_call.1} parent=1 // loop_header
      %s16 = sphi 0, %s20
      %p17 = scmp.ge.s32.totalorder %s16, 4
      %s23 = sphi 0, %s35
      %s24 = sphi 0, %s31
      %s25 = sphi 0, %s23
      %s26 = sphi 0, %s24
      %s27 = sphi 0, %s25
      %s28 = sphi 0, %s26
      %s40 = sphi 0, %s42
      %s43 = sphi 0, %s40
      %s44 = sphi 0, %s43
      %s60 = sphi 0, %s44
      %s66 = sphi 0, %s68
      %s69 = sphi 0, %s66
      %s70 = sphi 0, %s69
      %s86 = sphi 0, %s70
      %s90 = sphi 0, %s90
      %s92 = sphi 0, %s90
      %s93 = sphi 0, %s92
      %s107 = sphi 0, %s93
      %s115 = sphi 0, %s117
      %s118 = sphi 0, %s115
      %s119 = sphi 0, %s118
      %s135 = sphi 0, %s119
    $region4: #{tpu_custom_call.1} parent=1 // loop_header_branch
      %19 = sbr.rel (%p17) target = $region8
    $region5: #{tpu_custom_call.1} parent=1 // loop_body
      %s21 = ssub.s32 %s16, 1
      %s22 = ssub.s32 %s16, 2
      %s29 = sadd.s32 1, %s24
      %p30 = scmp.ge.s32.totalorder %s29, 1
      %s31 = scalar_select %p30, 0, %s29
      %s32 = sadd.s32 1, %s23
      %s33 = scalar_select %p30, %s32, %s23
      %p34 = scmp.ge.s32.totalorder %s33, 2
      %s35 = scalar_select %p34, 0, %s33
      %s36 = ssub.s32 %s23, %s35
      %s37 = ssub.s32 %s24, %s31
      %s38 = sor.u32 %s36, %s37
      %p39 = scmp.eq.s32.totalorder %s38, 0
      %s41 = sadd.s32 %s40, 1
      %s42 = scalar_select %p39, %s40, %s41
      %p45 = pneg %p39
      %p46 = scmp.eq.s32.totalorder %s16, 1
      %p47 = por %p45, %p46
      %p48 = scmp.ne.s32.totalorder %s40, %s43
      %p49 = scmp.eq.s32.totalorder %s16, 0
      %p50 = por %p48, %p49
      %p51 = scmp.ne.s32.totalorder %s40, %s43
      %p52 = scmp.eq.s32.totalorder %s21, 1
      %p53 = por %p51, %p52
      %p54 = scmp.ne.s32.totalorder %s43, %s44
      %p55 = scmp.eq.s32.totalorder %s21, 0
      %p56 = por %p54, %p55
      %p57 = scmp.ne.s32.totalorder %s43, %s44
      %p58 = scmp.eq.s32.totalorder %s22, 1
      %p59 = por %p57, %p58
      %p61 = scmp.ne.s32.totalorder %s44, %s60
      %p62 = scmp.eq.s32.totalorder %s22, 0
      %p63 = por %p61, %p62
      %s64 = ssub.s32 %s24, %s31
      %p65 = scmp.eq.s32.totalorder %s64, 0
      %s67 = sadd.s32 %s66, 1
      %s68 = scalar_select %p65, %s66, %s67
      %p71 = pneg %p65
      %p72 = scmp.eq.s32.totalorder %s16, 1
      %p73 = por %p71, %p72
      %p74 = scmp.ne.s32.totalorder %s66, %s69
      %p75 = scmp.eq.s32.totalorder %s16, 0
      %p76 = por %p74, %p75
      %p77 = scmp.ne.s32.totalorder %s66, %s69
      %p78 = scmp.eq.s32.totalorder %s21, 1
      %p79 = por %p77, %p78
      %p80 = scmp.ne.s32.totalorder %s69, %s70
      %p81 = scmp.eq.s32.totalorder %s21, 0
      %p82 = por %p80, %p81
      %p83 = scmp.ne.s32.totalorder %s69, %s70
      %p84 = scmp.eq.s32.totalorder %s22, 1
      %p85 = por %p83, %p84
      %p87 = scmp.ne.s32.totalorder %s70, %s86
      %p88 = scmp.eq.s32.totalorder %s22, 0
      %p89 = por %p87, %p88
      %s91 = sadd.s32 %s90, 1
      %p94 = scmp.eq.s32.totalorder %s16, 1
      %p95 = scmp.ne.s32.totalorder %s90, %s92
      %p96 = scmp.eq.s32.totalorder %s16, 0
      %p97 = por %p95, %p96
      %p98 = scmp.ne.s32.totalorder %s90, %s92
      %p99 = scmp.eq.s32.totalorder %s21, 1
      %p100 = por %p98, %p99
      %p101 = scmp.ne.s32.totalorder %s92, %s93
      %p102 = scmp.eq.s32.totalorder %s21, 0
      %p103 = por %p101, %p102
      %p104 = scmp.ne.s32.totalorder %s92, %s93
      %p105 = scmp.eq.s32.totalorder %s22, 1
      %p106 = por %p104, %p105
      %p108 = scmp.ne.s32.totalorder %s93, %s107
      %p109 = scmp.eq.s32.totalorder %s22, 0
      %p110 = por %p108, %p109
      %s111 = ssub.s32 %s23, %s35
      %s112 = ssub.s32 %s24, %s31
      %s113 = sor.u32 %s111, %s112
      %p114 = scmp.eq.s32.totalorder %s113, 0
      %s116 = sadd.s32 %s115, 1
      %s117 = scalar_select %p114, %s115, %s116
      %p120 = pneg %p114
      %p121 = scmp.eq.s32.totalorder %s16, 1
      %p122 = por %p120, %p121
      %p123 = scmp.ne.s32.totalorder %s115, %s118
      %p124 = scmp.eq.s32.totalorder %s16, 0
      %p125 = por %p123, %p124
      %p126 = scmp.ne.s32.totalorder %s115, %s118
      %p127 = scmp.eq.s32.totalorder %s21, 1
      %p128 = por %p126, %p127
      %p129 = scmp.ne.s32.totalorder %s118, %s119
      %p130 = scmp.eq.s32.totalorder %s21, 0
      %p131 = por %p129, %p130
      %p132 = scmp.ne.s32.totalorder %s118, %s119
      %p133 = scmp.eq.s32.totalorder %s22, 1
      %p134 = por %p132, %p133
      %p136 = scmp.ne.s32.totalorder %s119, %s135
      %p137 = scmp.eq.s32.totalorder %s22, 0
      %p138 = por %p136, %p137
      %p139 = scmp.le.s32.totalorder 1, %s16
      %p140 = scmp.lt.s32.totalorder %s16, 3
      %p141 = pnand %p139, %p140
      %p142 = pneg %p141
      // Predicated region
      $region9: #{tpu_custom_call.1} parent=5 // pred_check
        _
      $region10: #{tpu_custom_call.1} parent=5 // pred_check_branch
        %144 = sbr.rel (%p141) target = $region12
      $region11: #{tpu_custom_call.1} parent=5 // pred_region
        %s145 = ssub.s32 %s16, 1
        // Predicated region
        $region13: #{tpu_custom_call.1} parent=11 // pred_check
          %p146 = pneg %p82
        $region14: #{tpu_custom_call.1} parent=11 // pred_check_branch
          %148 = sbr.rel (%p146) target = $region16
        $region15: #{tpu_custom_call.1} parent=11 // pred_region
          %s150 = ssub.s32 64, 64
          %151 = vsyncadd [#allocation6], %s150
          %s152 = smul.addr %s26, 64
          %s153 = scalar_lea.hbm %s1, %s152
          %s155 = sshll.u32 [#allocation5], 4
          %s156 = int_to_ptr.vmem [resolvable:$true] %s155
          %158 = dma.hbm_to_vmem [thread:$0]  %s153, 64, %s156, [#allocation6]
        $region16: #{tpu_custom_call.1} parent=11 // pred_fallthru
          _
        // Predicated region
        $region17: #{tpu_custom_call.1} parent=11 // pred_check
          %p159 = pneg %p103
        $region18: #{tpu_custom_call.1} parent=11 // pred_check_branch
          %161 = sbr.rel (%p159) target = $region20
        $region19: #{tpu_custom_call.1} parent=11 // pred_region
          %s163 = ssub.s32 64, 64
          %164 = vsyncadd [#allocation6], %s163
          %s166 = sshll.u32 [#allocation7], 4
          %s167 = int_to_ptr.vmem [resolvable:$true] %s166
          %169 = dma.hbm_to_vmem [thread:$0]  %s2, 64, %s167, [#allocation6]
        $region20: #{tpu_custom_call.1} parent=11 // pred_fallthru
          _
      $region12: #{tpu_custom_call.1} parent=5 // pred_fallthru
        _
      %p170 = scmp.lt.s32.totalorder %s16, 2
      // Predicated region
      $region21: #{tpu_custom_call.1} parent=5 // pred_check
        %p171 = pneg %p170
      $region22: #{tpu_custom_call.1} parent=5 // pred_check_branch
        %173 = sbr.rel (%p171) target = $region24
      $region23: #{tpu_custom_call.1} parent=5 // pred_region
        // Predicated region
        $region25: #{tpu_custom_call.1} parent=23 // pred_check
          %p174 = pneg %p50
        $region26: #{tpu_custom_call.1} parent=23 // pred_check_branch
          %176 = sbr.rel (%p174) target = $region28
        $region27: #{tpu_custom_call.1} parent=23 // pred_region
          %s177 = sand.u32 %s40, 1
          %s178 = scalar_lea.sflag [#allocation3], %s177
          %s179 = sand.u32 %s40, 1
          %s180 = smul.addr %s179, 8
          %s181 = scalar_lea.vmem [#allocation2], %s180
          %s183 = ssub.s32 128, 128
          %184 = vsyncadd %s178, %s183
          %s185 = smul.addr %s24, 2
          %s186 = smul.addr %s23, 2
          %s187 = sadd.s32 %s185, %s186
          %s188 = smul.addr %s187, 64
          %s189 = scalar_lea.hbm %s0, %s188
          %s191 = sshll.u32 %s181, 4
          %s192 = int_to_ptr.vmem [resolvable:$true] %s191
          %194 = dma.hbm_to_vmem [thread:$0]  %s189, 128, %s192, %s178
        $region28: #{tpu_custom_call.1} parent=23 // pred_fallthru
          _
      $region24: #{tpu_custom_call.1} parent=5 // pred_fallthru
        _
      %p195 = scmp.le.s32.totalorder 1, %s16
      %p196 = scmp.lt.s32.totalorder %s16, 3
      %p197 = pnand %p195, %p196
      %p198 = pneg %p197
      // Predicated region
      $region29: #{tpu_custom_call.1} parent=5 // pred_check
        _
      $region30: #{tpu_custom_call.1} parent=5 // pred_check_branch
        %200 = sbr.rel (%p197) target = $region32
      $region31: #{tpu_custom_call.1} parent=5 // pred_region
        %s201 = ssub.s32 %s16, 1
        %s202 = sand.u32 %s43, 1
        %s203 = scalar_lea.sflag [#allocation3], %s202
        %s204 = sand.u32 %s43, 1
        %s205 = smul.addr %s204, 8
        %s206 = scalar_lea.vmem [#allocation2], %s205
        // Predicated region
        $region33: #{tpu_custom_call.1} parent=31 // pred_check
          %p207 = pneg %p56
        $region34: #{tpu_custom_call.1} parent=31 // pred_check_branch
          %209 = sbr.rel (%p207) target = $region36
        $region35: #{tpu_custom_call.1} parent=31 // pred_region
          %210 = dma.done %s203, 128
        $region36: #{tpu_custom_call.1} parent=31 // pred_fallthru
          _
        // Predicated region
        $region37: #{tpu_custom_call.1} parent=31 // pred_check
          %p211 = pneg %p82
        $region38: #{tpu_custom_call.1} parent=31 // pred_check_branch
          %213 = sbr.rel (%p211) target = $region40
        $region39: #{tpu_custom_call.1} parent=31 // pred_region
          %214 = dma.done [#allocation6], 64
        $region40: #{tpu_custom_call.1} parent=31 // pred_fallthru
          _
        // Predicated region
        $region41: #{tpu_custom_call.1} parent=31 // pred_check
          %p215 = pneg %p103
        $region42: #{tpu_custom_call.1} parent=31 // pred_check_branch
          %217 = sbr.rel (%p215) target = $region44
        $region43: #{tpu_custom_call.1} parent=31 // pred_region
          %218 = dma.done [#allocation6], 64
        $region44: #{tpu_custom_call.1} parent=31 // pred_fallthru
          _
        %s219 = sand.u32 %s43, 1
        %s220 = scalar_lea.sflag [#allocation3], %s219
        %s221 = sand.u32 %s43, 1
        %s222 = smul.addr %s221, 8
        %s223 = scalar_lea.vmem [#allocation2], %s222
        %p224 = pneg %p56
        %p225 = pneg %p53
        %p226 = pneg %p82
        %p227 = pneg %p79
        %p228 = pneg %p103
        %p229 = pneg %p100
        %p230 = pneg %p131
        %p231 = pneg %p128
        %s232 = sand.u32 %s118, 1
        %s233 = scalar_lea.sflag [#allocation4], %s232
        %s234 = sand.u32 %s118, 1
        %s235 = smul.addr %s234, 8
        %s236 = scalar_lea.vmem [#allocation8], %s235
        %v237 = vld [vmem:[%s206] sm:$0xff]
        %v238 = vld [vmem:[#allocation5] sm:$0xf]
        %v239 = vld [vmem:[#allocation7] sm:$0xf]
        %v241 = vcombine.high %v237, %v237
        %243 = vrot.lane.b32.xlu0 %v237, 1
        %v244 = vpop.permute.xlu0 %243
        %245 = vrot.lane.b32.xlu0 %v241, 1
        %v246 = vpop.permute.xlu0 %245
        %v247 = vlaneseq
        %v248 = vand.u32 %v247, 127
        %vm249 = vcmp.lt.s32.totalorder %v248, 1
        %v250 = vsel %vm249, %v244, %v246
        %v251 = vsel %vm249, %v246, %v244
        %v253 = vlaneseq
        %v254 = vshrl.u32 %v253, 7
        %v255 = vsub.s32 0, %v254
        %v256 = vrot.slane %v239, %v255
        %v257 = vlaneseq
        %v258 = vshrl.u32 %v257, 7
        %v259 = vsub.s32 2, %v258
        %v260 = vrot.slane %v239, %v259
        %v263 = vlaneseq
        %v264 = vshrl.u32 %v263, 7
        %v265 = vsub.s32 0, %v264
        %v266 = vrot.slane %v256, %v265
        %v267 = vlaneseq
        %v268 = vshrl.u32 %v267, 7
        %v269 = vsub.s32 0, %v268
        %v270 = vrot.slane %v260, %v269
        %v271 = vmul.f32 %v251, %v266
        %v272 = vmul.f32 %v250, %v270
        %273 = vrot.lane.b32.xlu0 %v237, 127
        %v274 = vpop.permute.xlu0 %273
        %275 = vrot.lane.b32.xlu0 %v241, 127
        %v276 = vpop.permute.xlu0 %275
        %vm277 = vcmp.lt.s32.totalorder %v248, 127
        %v278 = vsel %vm277, %v274, %v276
        %v279 = vsel %vm277, %v276, %v274
        %v280 = vlaneseq
        %v281 = vshrl.u32 %v280, 7
        %v282 = vsub.s32 1, %v281
        %v283 = vrot.slane %v239, %v282
        %v284 = vlaneseq
        %v285 = vshrl.u32 %v284, 7
        %v286 = vsub.s32 3, %v285
        %v287 = vrot.slane %v239, %v286
        %v290 = vlaneseq
        %v291 = vshrl.u32 %v290, 7
        %v292 = vsub.s32 1, %v291
        %v293 = vrot.slane %v283, %v292
        %v294 = vlaneseq
        %v295 = vshrl.u32 %v294, 7
        %v296 = vsub.s32 1, %v295
        %v297 = vrot.slane %v287, %v296
        %v298 = vmul.f32 %v278, %v293
        %v299 = vmul.f32 %v279, %v297
        %v300 = vadd.s32 %v248, 128
        %vm301 = vcmp.ge.s32.totalorder %v248, 16
        %vm302 = vcmp.ge.s32.totalorder %v300, 16
        %v303 = vsel %vm301, 1, 0
        %v304 = vsel %vm302, 1, 0
        %v305 = vcvt.s32.f32 %v303
        %v306 = vcvt.s32.f32 %v304
        %vm307 = vcmp.lt.s32.totalorder %v248, 240
        %vm308 = vcmp.lt.s32.totalorder %v300, 240
        %v309 = vsel %vm307, 1, 0
        %v310 = vsel %vm308, 1, 0
        %v311 = vcvt.s32.f32 %v309
        %v312 = vcvt.s32.f32 %v310
        %314 = vset.pattern.permute.xlu0 0
        %315 = vperm.xlu0 %314, %v238
        %v316 = vpop.permute.xlu0 %315
        %v318 = vmul.f32 %v271, %v316
        %v319 = vmul.f32 %v272, %v316
        %320 = vset.pattern.permute.xlu0 1
        %321 = vperm.xlu0 %320, %v238
        %v322 = vpop.permute.xlu0 %321
        %v324 = vunpack.c.l.s4 839922192
        %v325 = vunpack.c.0.s8 %v324
        %v326 = vlaneseq
        %v327 = vshrl.u32 %v326, 7
        %v328 = vsub.s32 %v325, %v327
        %v329 = vrot.slane %v322, %v328
        %v331 = vmul.f32 %v237, %v329
        %v333 = vcombine.high %v331, %v331
        %v335 = vadd.f32 %v318, %v331
        %v336 = vadd.f32 %v319, %v333
        %337 = vset.pattern.permute.xlu0 2
        %338 = vperm.xlu0 %337, %v238
        %v339 = vpop.permute.xlu0 %338
        %v341 = vmul.f32 %v298, %v339
        %v342 = vmul.f32 %v299, %v339
        %v343 = vadd.f32 %v335, %v341
        %v344 = vadd.f32 %v336, %v342
        %345 = vrot.lane.b32.xlu0 %v343, 16
        %v346 = vpop.permute.xlu0 %345
        %347 = vrot.lane.b32.xlu0 %v344, 16
        %v348 = vpop.permute.xlu0 %347
        %vm349 = vcmp.lt.s32.totalorder %v248, 16
        %v350 = vsel %vm349, %v346, %v348
        %v351 = vsel %vm349, %v348, %v346
        %v352 = vmul.f32 %v351, %v305
        %v353 = vmul.f32 %v350, %v306
        %354 = vset.pattern.permute.xlu0 3
        %355 = vperm.xlu0 %354, %v238
        %v356 = vpop.permute.xlu0 %355
        %v358 = vmul.f32 %v271, %v356
        %v359 = vmul.f32 %v272, %v356
        %360 = vset.pattern.permute.xlu0 4
        %361 = vperm.xlu0 %360, %v238
        %v362 = vpop.permute.xlu0 %361
        %v364 = vunpack.c.l.s4 839922192
        %v365 = vunpack.c.0.s8 %v364
        %v366 = vlaneseq
        %v367 = vshrl.u32 %v366, 7
        %v368 = vsub.s32 %v365, %v367
        %v369 = vrot.slane %v362, %v368
        %v371 = vmul.f32 %v237, %v369
        %v373 = vcombine.high %v371, %v371
        %v375 = vadd.f32 %v358, %v371
        %v376 = vadd.f32 %v359, %v373
        %377 = vset.pattern.permute.xlu0 5
        %378 = vperm.xlu0 %377, %v238
        %v379 = vpop.permute.xlu0 %378
        %v381 = vmul.f32 %v298, %v379
        %v382 = vmul.f32 %v299, %v379
        %v383 = vadd.f32 %v375, %v381
        %v384 = vadd.f32 %v376, %v382
        %v385 = vadd.f32 %v352, %v383
        %v386 = vadd.f32 %v353, %v384
        %387 = vset.pattern.permute.xlu0 6
        %388 = vperm.xlu0 %387, %v238
        %v389 = vpop.permute.xlu0 %388
        %v391 = vmul.f32 %v271, %v389
        %v392 = vmul.f32 %v272, %v389
        %393 = vset.pattern.permute.xlu0 7
        %394 = vperm.xlu0 %393, %v238
        %v395 = vpop.permute.xlu0 %394
        %v397 = vunpack.c.l.s4 839922192
        %v398 = vunpack.c.0.s8 %v397
        %v399 = vlaneseq
        %v400 = vshrl.u32 %v399, 7
        %v401 = vsub.s32 %v398, %v400
        %v402 = vrot.slane %v395, %v401
        %v404 = vmul.f32 %v237, %v402
        %v406 = vcombine.high %v404, %v404
        %v408 = vadd.f32 %v391, %v404
        %v409 = vadd.f32 %v392, %v406
        %410 = vset.pattern.permute.xlu0 8
        %411 = vperm.xlu0 %410, %v238
        %v412 = vpop.permute.xlu0 %411
        %v414 = vmul.f32 %v298, %v412
        %v415 = vmul.f32 %v299, %v412
        %v416 = vadd.f32 %v408, %v414
        %v417 = vadd.f32 %v409, %v415
        %418 = vrot.lane.b32.xlu0 %v416, 112
        %v419 = vpop.permute.xlu0 %418
        %420 = vrot.lane.b32.xlu0 %v417, 112
        %v421 = vpop.permute.xlu0 %420
        %vm422 = vcmp.lt.s32.totalorder %v248, 112
        %v423 = vsel %vm422, %v419, %v421
        %v424 = vsel %vm422, %v421, %v419
        %v425 = vmul.f32 %v423, %v311
        %v426 = vmul.f32 %v424, %v312
        %v427 = vadd.f32 %v385, %v425
        %v428 = vadd.f32 %v386, %v426
        %429 = vset.pattern.permute.xlu0 9
        %430 = vperm.xlu0 %429, %v238
        %v431 = vpop.permute.xlu0 %430
        %v433 = vadd.f32 %v427, %v431
        %v434 = vadd.f32 %v428, %v431
        %v435 = vxor.u32 %v433, 2147483648
        %v436 = vxor.u32 %v434, 2147483648
        %v437 = vmul.f32 %v435, 1.442695
        %v438 = vpow.pop %v437
        %v439 = vmul.f32 %v436, 1.442695
        %v440 = vpow.pop %v439
        %v441 = vadd.f32 %v438, 1.0
        %v442 = vadd.f32 %v440, 1.0
        %v443 = vrcp.pop %v441
        %v444 = vmul.f32 1.0, %v443
        %v445 = vrcp.pop %v442
        %v446 = vmul.f32 1.0, %v445
        %v449 = vcombine.low %v444, %v446
        %v451 = vmul.f32 %v237, %v449
        %452 = vst [vmem:[%s236] sm:$0xff] %v451
        %s453 = sand.u32 %s118, 1
        %s454 = scalar_lea.sflag [#allocation4], %s453
        %s455 = sand.u32 %s118, 1
        %s456 = smul.addr %s455, 8
        %s457 = scalar_lea.vmem [#allocation8], %s456
        // Predicated region
        $region45: #{tpu_custom_call.1} parent=31 // pred_check
          %p458 = pneg %p128
        $region46: #{tpu_custom_call.1} parent=31 // pred_check_branch
          %460 = sbr.rel (%p458) target = $region48
        $region47: #{tpu_custom_call.1} parent=31 // pred_region
          %s462 = ssub.s32 128, 128
          %463 = vsyncadd %s454, %s462
          %s464 = smul.addr %s26, 2
          %s465 = smul.addr %s25, 2
          %s466 = sadd.s32 %s464, %s465
          %s467 = smul.addr %s466, 64
          %s468 = scalar_lea.hbm %s3, %s467
          %s470 = sshll.u32 %s457, 4
          %s471 = int_to_ptr.vmem [resolvable:$true] %s470
          %473 = dma.vmem_to_hbm [thread:$0]  %s471, 128, %s468, %s454
        $region48: #{tpu_custom_call.1} parent=31 // pred_fallthru
          _
      $region32: #{tpu_custom_call.1} parent=5 // pred_fallthru
        _
      %p474 = scmp.le.s32.totalorder 2, %s16
      // Predicated region
      $region49: #{tpu_custom_call.1} parent=5 // pred_check
        %p475 = pneg %p474
      $region50: #{tpu_custom_call.1} parent=5 // pred_check_branch
        %477 = sbr.rel (%p475) target = $region52
      $region51: #{tpu_custom_call.1} parent=5 // pred_region
        %s478 = ssub.s32 %s16, 2
        // Predicated region
        $region53: #{tpu_custom_call.1} parent=51 // pred_check
          %p479 = pneg %p134
        $region54: #{tpu_custom_call.1} parent=51 // pred_check_branch
          %481 = sbr.rel (%p479) target = $region56
        $region55: #{tpu_custom_call.1} parent=51 // pred_region
          %s482 = sand.u32 %s119, 1
          %s483 = scalar_lea.sflag [#allocation4], %s482
          %s484 = sand.u32 %s119, 1
          %s485 = smul.addr %s484, 8
          %s486 = scalar_lea.vmem [#allocation8], %s485
          %487 = dma.done %s483, 128
        $region56: #{tpu_custom_call.1} parent=51 // pred_fallthru
          _
      $region52: #{tpu_custom_call.1} parent=5 // pred_fallthru
        _
    $region6: #{tpu_custom_call.1} parent=1 // loop_footer
      %s20 = sadd.s32 1, %s16
    $region7: #{tpu_custom_call.1} parent=1 // loop_footer_branch
      %15 = sbr.rel target = $region3
    $region8: #{tpu_custom_call.1} parent=1 // loop_exit
      _
    %488 = vsyncpa [#allocation3], 1
    %s489 = scalar_lea.sflag [#allocation3], 1
    %490 = vsyncpa %s489, 1
    %491 = vsyncpa [#allocation6], 1
    %492 = vsyncpa [#allocation4], 1
    %s493 = scalar_lea.sflag [#allocation4], 1
    %494 = vsyncpa %s493, 1

</llo_original>
